<compile_context>
chip_gen: v7x
topology: tpu7x:2x2x1
jax: 0.10.0
libtpu: 0.0.40
codegen_flags: <defaults>
</compile_context>

<pallas_src>
import functools

import numpy as np
import jax
import jax.numpy as jnp
from jax import lax
from jax.experimental import pallas as pl
from jax.experimental.pallas import tpu as pltpu


# ----------------------------------------------------------------------------
# Host-side parameter / buffer construction (one-time weight prep; reproduces
# the PyTorch module's __init__ and its forward-pass quirks exactly)
# ----------------------------------------------------------------------------
def _rotary_vectors(n_ropes, d_head, rope_coef):
    # Faithful port of RoPEMaskedAttentionHead._get_rotary_vectors, including
    # the source's quirks: theta uses (i - 1), and sin[pos, 2i+1] = cos(m_theta).
    sin = np.zeros((n_ropes, d_head), dtype=np.float32)
    cos = np.zeros((n_ropes, d_head), dtype=np.float32)
    for position in range(n_ropes):
        for i in range(d_head // 2):
            theta = 10000.0 ** (-2.0 * (i - 1) / d_head)
            m_theta = position * theta * rope_coef
            cos[position, 2 * i] = np.cos(m_theta)
            cos[position, 2 * i + 1] = np.cos(m_theta)
            sin[position, 2 * i] = -np.sin(m_theta)
            sin[position, 2 * i + 1] = np.cos(m_theta)
    return sin, cos


def _swap_matrix(d_head):
    # The PyTorch forward does
    #   q[:, :, ::2], q[:, :, 1::2] = (q[:, :, 1::2], q[:, :, 0::2])
    # where the RHS entries are *views* of q, so the second assignment reads
    # already-overwritten values.  Net torch semantics:
    #   q_new[..., 2i] = q_old[..., 2i+1];  q_new[..., 2i+1] = q_old[..., 2i+1]
    # Since q = x @ W + b is linear, that swap is folded into the weights as a
    # right-multiplication by this selection matrix (once, host-side).
    # Do NOT "fix" this to standard RoPE: it intentionally matches the module.
    P = np.zeros((d_head, d_head), dtype=np.float32)
    for i in range(d_head // 2):
        P[2 * i + 1, 2 * i] = 1.0
        P[2 * i + 1, 2 * i + 1] = 1.0
    return P


def _fuse_params(wq, bq, wk, bk, wv, bv, sin_s, cos_s):
    """Fused projection weight/bias + RoPE multiply table, 128-lane padded."""
    n_heads, d_model, d_head = wq.shape
    dm = n_heads * d_head
    dpad = ((dm + 127) // 128) * 128               # lane-tile aligned block width
    P = jnp.asarray(_swap_matrix(d_head))

    def cat_w(w):   # (H, d_model, d_head) -> (d_model, dm) -> (d_model, dpad)
        w2 = jnp.transpose(w, (1, 0, 2)).reshape(d_model, dm)
        return jnp.pad(w2, ((0, 0), (0, dpad - dm)))

    def cat_b(b):   # (H, 1, d_head) -> (1, dm) -> (1, dpad)
        b2 = jnp.transpose(b, (1, 0, 2)).reshape(1, dm)
        return jnp.pad(b2, ((0, 0), (0, dpad - dm)))

    wq_sw = jnp.einsum('hme,ef->hmf', wq, P)
    bq_sw = jnp.einsum('hoe,ef->hof', bq, P)
    wk_sw = jnp.einsum('hme,ef->hmf', wk, P)
    bk_sw = jnp.einsum('hoe,ef->hof', bk, P)

    # [ q | q_swapped | k | k_swapped | v ], each block dpad lanes wide.
    w_big = jnp.concatenate(
        [cat_w(wq), cat_w(wq_sw), cat_w(wk), cat_w(wk_sw), cat_w(wv)], axis=1)
    b_big = jnp.concatenate(
        [cat_b(bq), cat_b(bq_sw), cat_b(bk), cat_b(bk_sw), cat_b(bv)], axis=1)

    scale = 1.0 / (float(d_head) ** 0.5)           # 1/sqrt(d_head) folded into q
    def pad_tab(t):
        return jnp.pad(t, ((0, 0), (0, dpad - dm)))
    cos_t = jnp.tile(cos_s, (1, n_heads))          # (seq, dm)
    sin_t = jnp.tile(sin_s, (1, n_heads))
    rope_tab = jnp.concatenate(
        [pad_tab(cos_t * scale), pad_tab(sin_t * scale),
         pad_tab(cos_t), pad_tab(sin_t)], axis=1)  # (seq, 4*dpad); no "ones" block
    return w_big, b_big, rope_tab


# ----------------------------------------------------------------------------
# Pallas kernel: bt batch elements per grid step, batch folded into matmul rows
# ----------------------------------------------------------------------------
def _mha_kernel(x_ref, w_ref, b_ref, rope_ref, wo_ref, bo_ref, o_ref, ocat_ref,
                *, n_heads, d_head, seq, bt):
    dm = n_heads * d_head
    dpad = w_ref.shape[1] // 5
    n_rows = bt * seq                                             # matmul M dim

    x = x_ref[...]                                                # (n_rows, d_model) f32

    # Fused projection [q | q_sw | k | k_sw | v] in one bf16 MXU matmul (f32 acc).
    qkv = jnp.dot(x.astype(jnp.bfloat16), w_ref[...],
                  preferred_element_type=jnp.float32) + b_ref[...]

    # RoPE (+ 1/sqrt(d_head) folded into the q blocks): one f32 vreg-aligned mul.
    t = qkv[:, :4 * dpad] * rope_ref[...]
    q_rot = t[:, 0:dpad] + t[:, dpad:2 * dpad]                    # (n_rows, dpad)
    k_rot = t[:, 2 * dpad:3 * dpad] + t[:, 3 * dpad:4 * dpad]
    v = qkv[:, 4 * dpad:5 * dpad]                                 # no ones-multiply

    # Block-diagonal causal bias, generated in-kernel (no O(seq^2) VMEM operand).
    row = lax.broadcasted_iota(jnp.int32, (n_rows, n_rows), 0)
    col = lax.broadcasted_iota(jnp.int32, (n_rows, n_rows), 1)
    if seq & (seq - 1) == 0:                                      # power of two: shift
        sh = seq.bit_length() - 1
        same_batch = (row >> sh) == (col >> sh)
    else:
        same_batch = (row // seq) == (col // seq)
    keep = same_batch & (col <= row)
    bias = jnp.where(keep, jnp.float32(0.0), jnp.float32(-1e30))

    q_b = q_rot.astype(jnp.bfloat16)
    k_b = k_rot.astype(jnp.bfloat16)
    v_b = v.astype(jnp.bfloat16)

    for h in range(n_heads):                                      # static unroll (tiny)
        lo = h * d_head
        hi = lo + d_head
        s = lax.dot_general(q_b[:, lo:hi], k_b[:, lo:hi],
                            (((1,), (1,)), ((), ())),
                            preferred_element_type=jnp.float32) + bias
        m = jnp.max(s, axis=-1, keepdims=True)
        e = jnp.exp(s - m)                                        # masked -> exactly 0
        r = pl.reciprocal(jnp.sum(e, axis=-1, keepdims=True), approx=True)
        p = (e * r).astype(jnp.bfloat16)
        ocat_ref[:, lo:hi] = jnp.dot(p, v_b[:, lo:hi],
                                     preferred_element_type=jnp.float32)

    # Single fused output projection over all heads (one MXU push, contraction dm).
    out = jnp.dot(ocat_ref[...].astype(jnp.bfloat16), wo_ref[...],
                  preferred_element_type=jnp.float32) + bo_ref[...]
    o_ref[...] = out                                              # (n_rows, d_model)


# ----------------------------------------------------------------------------
# Wrapper
# ----------------------------------------------------------------------------
def rope_mha(x, w_big, b_big, rope_tab, wo, bo, *, n_heads, d_head, bt=None):
    b, seq, d_model = x.shape
    dm = n_heads * d_head
    if bt is None:
        bt = b                                       # whole batch in one grid step
    assert b % bt == 0

    xf = x.reshape(b * seq, d_model)                 # batch folded into matmul M dim
    rope_full = jnp.tile(rope_tab, (bt, 1))          # positions repeat per batch elem

    kernel = functools.partial(_mha_kernel, n_heads=n_heads, d_head=d_head,
                               seq=seq, bt=bt)
    out = pl.pallas_call(
        kernel,
        out_shape=jax.ShapeDtypeStruct((b * seq, d_model), jnp.float32),
        grid_spec=pltpu.PrefetchScalarGridSpec(
            num_scalar_prefetch=0,
            grid=(b // bt,),
            in_specs=[
                pl.BlockSpec((bt * seq, d_model), lambda i: (i, 0)),   # x rows
                pl.BlockSpec(w_big.shape, lambda i: (0, 0)),           # fused W (bf16)
                pl.BlockSpec(b_big.shape, lambda i: (0, 0)),           # fused bias (f32)
                pl.BlockSpec(rope_full.shape, lambda i: (0, 0)),       # RoPE table (f32)
                pl.BlockSpec(wo.shape, lambda i: (0, 0)),              # out-proj W (bf16)
                pl.BlockSpec(bo.shape, lambda i: (0, 0)),              # out-proj b (f32)
            ],
            out_specs=pl.BlockSpec((bt * seq, d_model), lambda i: (i, 0)),
            scratch_shapes=[pltpu.VMEM((bt * seq, dm), jnp.float32)],  # per-head concat
        ),
        compiler_params=pltpu.CompilerParams(
            dimension_semantics=("parallel",)),
    )(xf, w_big, b_big, rope_full, wo, bo)
    return out.reshape(b, seq, d_model)


# ----------------------------------------------------------------------------
# Pure-JAX f32 reference (same semantics, including the aliased in-place swap)
# ----------------------------------------------------------------------------
def reference(x, wq, bq, wk, bk, wv, bv, wo_t, bo, sin_s, cos_s):
    n_heads, _, d_head = wq.shape
    seq = x.shape[1]
    outs = []
    for h in range(n_heads):
        q = x @ wq[h] + bq[h]
        k = x @ wk[h] + bk[h]
        v = x @ wv[h] + bv[h]
        q_sw = jnp.repeat(q[..., 1::2], 2, axis=-1)
        k_sw = jnp.repeat(k[..., 1::2], 2, axis=-1)
        q_rot = q * cos_s + q_sw * sin_s
        k_rot = k * cos_s + k_sw * sin_s
        s = jnp.einsum('bqd,bkd->bqk', q_rot, k_rot) / np.sqrt(d_head)
        mask = np.tril(np.ones((seq, seq), dtype=bool))
        s = jnp.where(mask, s, -np.inf)
        p = jax.nn.softmax(s, axis=-1)
        outs.append(jnp.einsum('bqk,bkd->bqd', p, v))
    cat = jnp.concatenate(outs, axis=-1)
    return cat @ wo_t + bo


if __name__ == "__main__":
    # Small config consistent with the module.
    batch, seq, d_model, n_heads = 2, 8, 32, 4
    d_head = d_model // n_heads
    n_ropes = 16
    rope_coef = 1.0

    key = jax.random.PRNGKey(0)
    kx, k0, k1, k2, k3, k4, k5, k6, k7 = jax.random.split(key, 9)

    x = jax.random.normal(kx, (batch, seq, d_model), jnp.float32)

    # Per-head Linear(d_model, d_head) weights stored pre-transposed for x @ W.
    wq = jax.random.normal(k0, (n_heads, d_model, d_head), jnp.float32) * 0.1
    bq = jax.random.normal(k1, (n_heads, 1, d_head), jnp.float32) * 0.1
    wk = jax.random.normal(k2, (n_heads, d_model, d_head), jnp.float32) * 0.1
    bk = jax.random.normal(k3, (n_heads, 1, d_head), jnp.float32) * 0.1
    wv = jax.random.normal(k4, (n_heads, d_model, d_head), jnp.float32) * 0.1
    bv = jax.random.normal(k5, (n_heads, 1, d_head), jnp.float32) * 0.1

    # Final Linear(d_model, d_model), pre-transposed for x @ W.
    wo_t = jax.random.normal(k6, (d_model, d_model), jnp.float32) * 0.1
    bo = jax.random.normal(k7, (1, d_model), jnp.float32) * 0.1

    sin_full, cos_full = _rotary_vectors(n_ropes, d_head, rope_coef)
    sin_s = jnp.asarray(sin_full[:seq])
    cos_s = jnp.asarray(cos_full[:seq])

    # One-time parameter fusion + bf16 cast of the MXU weight operands.
    w_big, b_big, rope_tab = _fuse_params(wq, bq, wk, bk, wv, bv, sin_s, cos_s)
    w_big_bf = w_big.astype(jnp.bfloat16)
    wo_bf = wo_t.astype(jnp.bfloat16)

    out = rope_mha(x, w_big_bf, b_big, rope_tab, wo_bf, bo,
                   n_heads=n_heads, d_head=d_head)
    out = jax.block_until_ready(out)

    ref = reference(x, wq, bq, wk, bk, wv, bv, wo_t, bo, sin_s, cos_s)
    # Tolerance loosened vs. a pure-f32 kernel: bf16 MXU operands + approx
    # reciprocal in the softmax normalization (expected error ~1e-2 relative).
    np.testing.assert_allclose(np.asarray(out), np.asarray(ref),
                               rtol=2e-2, atol=2e-2)

    print("KERNEL_OK")
</pallas_src>

<mosaic_0001>
module attributes {stable_mosaic.version = 11 : i64} {
  func.func @_mha_kernel(%arg0: i32, %arg1: memref<16x32xf32, #tpu.memory_space<vmem>>, %arg2: memref<32x640xbf16, #tpu.memory_space<vmem>>, %arg3: memref<1x640xf32, #tpu.memory_space<vmem>>, %arg4: memref<16x512xf32, #tpu.memory_space<vmem>>, %arg5: memref<32x32xbf16, #tpu.memory_space<vmem>>, %arg6: memref<1x32xf32, #tpu.memory_space<vmem>>, %arg7: memref<16x32xf32, #tpu.memory_space<vmem>>, %arg8: memref<16x32xf32, #tpu.memory_space<vmem>>) attributes {dimension_semantics = [#tpu.dimension_semantics<parallel>], iteration_bounds = array<i64: 1>, scalar_prefetch = 0 : i64, scratch_operands = 1 : i64, tpu.core_type = #tpu.core_type<tc>, window_params = [{transform_indices = @transform_0, window_bounds = array<i64: 16, 32>}, {pipeline_mode = #tpu.pipeline_mode<synchronous>, transform_indices = @transform_1, window_bounds = array<i64: 32, 640>}, {pipeline_mode = #tpu.pipeline_mode<synchronous>, transform_indices = @transform_2, window_bounds = array<i64: 1, 640>}, {pipeline_mode = #tpu.pipeline_mode<synchronous>, transform_indices = @transform_3, window_bounds = array<i64: 16, 512>}, {pipeline_mode = #tpu.pipeline_mode<synchronous>, transform_indices = @transform_4, window_bounds = array<i64: 32, 32>}, {pipeline_mode = #tpu.pipeline_mode<synchronous>, transform_indices = @transform_5, window_bounds = array<i64: 1, 32>}, {transform_indices = @transform_6, window_bounds = array<i64: 16, 32>}]} {
    %c0 = arith.constant 0 : index
    %c0_0 = arith.constant 0 : index
    %0 = vector.load %arg1[%c0, %c0_0] : memref<16x32xf32, #tpu.memory_space<vmem>>, vector<16x32xf32>
    %1 = arith.truncf %0 : vector<16x32xf32> to vector<16x32xbf16>
    %c0_1 = arith.constant 0 : index
    %c0_2 = arith.constant 0 : index
    %2 = vector.load %arg2[%c0_1, %c0_2] : memref<32x640xbf16, #tpu.memory_space<vmem>>, vector<32x640xbf16>
    %cst = arith.constant dense<0.000000e+00> : vector<16x640xf32>
    %3 = tpu.matmul %1, %2, %cst {dimension_numbers = #tpu.dot_dimension_numbers<[1], [0], [0], [1], [0, 0, 1, 1], [], []>} : vector<16x32xbf16>, vector<32x640xbf16>, vector<16x640xf32> -> vector<16x640xf32>
    %c0_3 = arith.constant 0 : index
    %c0_4 = arith.constant 0 : index
    %4 = vector.load %arg3[%c0_3, %c0_4] : memref<1x640xf32, #tpu.memory_space<vmem>>, vector<1x640xf32>
    %5 = vector.broadcast %4 : vector<1x640xf32> to vector<16x640xf32>
    %6 = arith.addf %3, %5 : vector<16x640xf32>
    %7 = vector.extract_strided_slice %6 {offsets = [0, 0], sizes = [16, 512], strides = [1, 1]} : vector<16x640xf32> to vector<16x512xf32>
    %c0_5 = arith.constant 0 : index
    %c0_6 = arith.constant 0 : index
    %8 = vector.load %arg4[%c0_5, %c0_6] : memref<16x512xf32, #tpu.memory_space<vmem>>, vector<16x512xf32>
    %9 = arith.mulf %7, %8 : vector<16x512xf32>
    %10 = vector.extract_strided_slice %9 {offsets = [0, 0], sizes = [16, 128], strides = [1, 1]} : vector<16x512xf32> to vector<16x128xf32>
    %11 = vector.extract_strided_slice %9 {offsets = [0, 128], sizes = [16, 128], strides = [1, 1]} : vector<16x512xf32> to vector<16x128xf32>
    %12 = arith.addf %10, %11 : vector<16x128xf32>
    %13 = vector.extract_strided_slice %9 {offsets = [0, 256], sizes = [16, 128], strides = [1, 1]} : vector<16x512xf32> to vector<16x128xf32>
    %14 = vector.extract_strided_slice %9 {offsets = [0, 384], sizes = [16, 128], strides = [1, 1]} : vector<16x512xf32> to vector<16x128xf32>
    %15 = arith.addf %13, %14 : vector<16x128xf32>
    %16 = vector.extract_strided_slice %6 {offsets = [0, 512], sizes = [16, 128], strides = [1, 1]} : vector<16x640xf32> to vector<16x128xf32>
    %17 = tpu.iota {dimensions = array<i32: 0>} : vector<16x16xi32>
    %18 = tpu.iota {dimensions = array<i32: 1>} : vector<16x16xi32>
    %c3_i32 = arith.constant 3 : i32
    %19 = vector.broadcast %c3_i32 : i32 to vector<16x16xi32>
    %20 = arith.shrsi %17, %19 : vector<16x16xi32>
    %c3_i32_7 = arith.constant 3 : i32
    %21 = vector.broadcast %c3_i32_7 : i32 to vector<16x16xi32>
    %22 = arith.shrsi %18, %21 : vector<16x16xi32>
    %23 = arith.cmpi eq, %20, %22 : vector<16x16xi32>
    %24 = arith.cmpi sle, %18, %17 : vector<16x16xi32>
    %25 = arith.andi %23, %24 : vector<16x16xi1>
    %cst_8 = arith.constant 0.000000e+00 : f32
    %cst_9 = arith.constant -1.000000e+30 : f32
    %26 = vector.broadcast %cst_8 : f32 to vector<16x16xf32>
    %27 = vector.broadcast %cst_9 : f32 to vector<16x16xf32>
    %28 = arith.select %25, %26, %27 : vector<16x16xi1>, vector<16x16xf32>
    %29 = arith.truncf %12 : vector<16x128xf32> to vector<16x128xbf16>
    %30 = arith.truncf %15 : vector<16x128xf32> to vector<16x128xbf16>
    %31 = arith.truncf %16 : vector<16x128xf32> to vector<16x128xbf16>
    %32 = vector.extract_strided_slice %29 {offsets = [0, 0], sizes = [16, 8], strides = [1, 1]} : vector<16x128xbf16> to vector<16x8xbf16>
    %33 = vector.extract_strided_slice %30 {offsets = [0, 0], sizes = [16, 8], strides = [1, 1]} : vector<16x128xbf16> to vector<16x8xbf16>
    %cst_10 = arith.constant dense<0.000000e+00> : vector<16x16xf32>
    %34 = tpu.matmul %32, %33, %cst_10 {dimension_numbers = #tpu.dot_dimension_numbers<[1], [1], [0], [0], [0, 0, 1, 0], [], []>} : vector<16x8xbf16>, vector<16x8xbf16>, vector<16x16xf32> -> vector<16x16xf32>
    %35 = arith.addf %34, %28 : vector<16x16xf32>
    %cst_11 = arith.constant dense<0xFF800000> : vector<16xf32>
    %36 = vector.multi_reduction <maximumf>, %35, %cst_11 [1] : vector<16x16xf32> to vector<16xf32>
    %37 = vector.shape_cast %36 : vector<16xf32> to vector<16x1xf32>
    %38 = vector.broadcast %37 : vector<16x1xf32> to vector<16x16xf32>
    %39 = arith.subf %35, %38 : vector<16x16xf32>
    %40 = math.exp %39 : vector<16x16xf32>
    %cst_12 = arith.constant dense<0.000000e+00> : vector<16xf32>
    %41 = vector.multi_reduction <add>, %40, %cst_12 [1] : vector<16x16xf32> to vector<16xf32>
    %42 = vector.shape_cast %41 : vector<16xf32> to vector<16x1xf32>
    %43 = tpu.reciprocal %42 {approx = true} : vector<16x1xf32> -> vector<16x1xf32>
    %44 = vector.broadcast %43 : vector<16x1xf32> to vector<16x16xf32>
    %45 = arith.mulf %40, %44 : vector<16x16xf32>
    %46 = arith.truncf %45 : vector<16x16xf32> to vector<16x16xbf16>
    %47 = vector.extract_strided_slice %31 {offsets = [0, 0], sizes = [16, 8], strides = [1, 1]} : vector<16x128xbf16> to vector<16x8xbf16>
    %cst_13 = arith.constant dense<0.000000e+00> : vector<16x8xf32>
    %48 = tpu.matmul %46, %47, %cst_13 {dimension_numbers = #tpu.dot_dimension_numbers<[1], [0], [0], [1], [0, 0, 1, 1], [], []>} : vector<16x16xbf16>, vector<16x8xbf16>, vector<16x8xf32> -> vector<16x8xf32>
    %c0_14 = arith.constant 0 : index
    %c0_15 = arith.constant 0 : index
    %49 = vector.load %arg8[%c0_14, %c0_15] : memref<16x32xf32, #tpu.memory_space<vmem>>, vector<16x8xf32>
    tpu.vector_store %arg8[%c0_14, %c0_15], %48 {strides = array<i32>} : memref<16x32xf32, #tpu.memory_space<vmem>>, vector<16x8xf32>,
    %50 = vector.extract_strided_slice %29 {offsets = [0, 8], sizes = [16, 8], strides = [1, 1]} : vector<16x128xbf16> to vector<16x8xbf16>
    %51 = vector.extract_strided_slice %30 {offsets = [0, 8], sizes = [16, 8], strides = [1, 1]} : vector<16x128xbf16> to vector<16x8xbf16>
    %cst_16 = arith.constant dense<0.000000e+00> : vector<16x16xf32>
    %52 = tpu.matmul %50, %51, %cst_16 {dimension_numbers = #tpu.dot_dimension_numbers<[1], [1], [0], [0], [0, 0, 1, 0], [], []>} : vector<16x8xbf16>, vector<16x8xbf16>, vector<16x16xf32> -> vector<16x16xf32>
    %53 = arith.addf %52, %28 : vector<16x16xf32>
    %cst_17 = arith.constant dense<0xFF800000> : vector<16xf32>
    %54 = vector.multi_reduction <maximumf>, %53, %cst_17 [1] : vector<16x16xf32> to vector<16xf32>
    %55 = vector.shape_cast %54 : vector<16xf32> to vector<16x1xf32>
    %56 = vector.broadcast %55 : vector<16x1xf32> to vector<16x16xf32>
    %57 = arith.subf %53, %56 : vector<16x16xf32>
    %58 = math.exp %57 : vector<16x16xf32>
    %cst_18 = arith.constant dense<0.000000e+00> : vector<16xf32>
    %59 = vector.multi_reduction <add>, %58, %cst_18 [1] : vector<16x16xf32> to vector<16xf32>
    %60 = vector.shape_cast %59 : vector<16xf32> to vector<16x1xf32>
    %61 = tpu.reciprocal %60 {approx = true} : vector<16x1xf32> -> vector<16x1xf32>
    %62 = vector.broadcast %61 : vector<16x1xf32> to vector<16x16xf32>
    %63 = arith.mulf %58, %62 : vector<16x16xf32>
    %64 = arith.truncf %63 : vector<16x16xf32> to vector<16x16xbf16>
    %65 = vector.extract_strided_slice %31 {offsets = [0, 8], sizes = [16, 8], strides = [1, 1]} : vector<16x128xbf16> to vector<16x8xbf16>
    %cst_19 = arith.constant dense<0.000000e+00> : vector<16x8xf32>
    %66 = tpu.matmul %64, %65, %cst_19 {dimension_numbers = #tpu.dot_dimension_numbers<[1], [0], [0], [1], [0, 0, 1, 1], [], []>} : vector<16x16xbf16>, vector<16x8xbf16>, vector<16x8xf32> -> vector<16x8xf32>
    %c0_20 = arith.constant 0 : index
    %c8 = arith.constant 8 : index
    %67 = vector.load %arg8[%c0_20, %c8] : memref<16x32xf32, #tpu.memory_space<vmem>>, vector<16x8xf32>
    tpu.vector_store %arg8[%c0_20, %c8], %66 {strides = array<i32>} : memref<16x32xf32, #tpu.memory_space<vmem>>, vector<16x8xf32>,
    %68 = vector.extract_strided_slice %29 {offsets = [0, 16], sizes = [16, 8], strides = [1, 1]} : vector<16x128xbf16> to vector<16x8xbf16>
    %69 = vector.extract_strided_slice %30 {offsets = [0, 16], sizes = [16, 8], strides = [1, 1]} : vector<16x128xbf16> to vector<16x8xbf16>
    %cst_21 = arith.constant dense<0.000000e+00> : vector<16x16xf32>
    %70 = tpu.matmul %68, %69, %cst_21 {dimension_numbers = #tpu.dot_dimension_numbers<[1], [1], [0], [0], [0, 0, 1, 0], [], []>} : vector<16x8xbf16>, vector<16x8xbf16>, vector<16x16xf32> -> vector<16x16xf32>
    %71 = arith.addf %70, %28 : vector<16x16xf32>
    %cst_22 = arith.constant dense<0xFF800000> : vector<16xf32>
    %72 = vector.multi_reduction <maximumf>, %71, %cst_22 [1] : vector<16x16xf32> to vector<16xf32>
    %73 = vector.shape_cast %72 : vector<16xf32> to vector<16x1xf32>
    %74 = vector.broadcast %73 : vector<16x1xf32> to vector<16x16xf32>
    %75 = arith.subf %71, %74 : vector<16x16xf32>
    %76 = math.exp %75 : vector<16x16xf32>
    %cst_23 = arith.constant dense<0.000000e+00> : vector<16xf32>
    %77 = vector.multi_reduction <add>, %76, %cst_23 [1] : vector<16x16xf32> to vector<16xf32>
    %78 = vector.shape_cast %77 : vector<16xf32> to vector<16x1xf32>
    %79 = tpu.reciprocal %78 {approx = true} : vector<16x1xf32> -> vector<16x1xf32>
    %80 = vector.broadcast %79 : vector<16x1xf32> to vector<16x16xf32>
    %81 = arith.mulf %76, %80 : vector<16x16xf32>
    %82 = arith.truncf %81 : vector<16x16xf32> to vector<16x16xbf16>
    %83 = vector.extract_strided_slice %31 {offsets = [0, 16], sizes = [16, 8], strides = [1, 1]} : vector<16x128xbf16> to vector<16x8xbf16>
    %cst_24 = arith.constant dense<0.000000e+00> : vector<16x8xf32>
    %84 = tpu.matmul %82, %83, %cst_24 {dimension_numbers = #tpu.dot_dimension_numbers<[1], [0], [0], [1], [0, 0, 1, 1], [], []>} : vector<16x16xbf16>, vector<16x8xbf16>, vector<16x8xf32> -> vector<16x8xf32>
    %c0_25 = arith.constant 0 : index
    %c16 = arith.constant 16 : index
    %85 = vector.load %arg8[%c0_25, %c16] : memref<16x32xf32, #tpu.memory_space<vmem>>, vector<16x8xf32>
    tpu.vector_store %arg8[%c0_25, %c16], %84 {strides = array<i32>} : memref<16x32xf32, #tpu.memory_space<vmem>>, vector<16x8xf32>,
    %86 = vector.extract_strided_slice %29 {offsets = [0, 24], sizes = [16, 8], strides = [1, 1]} : vector<16x128xbf16> to vector<16x8xbf16>
    %87 = vector.extract_strided_slice %30 {offsets = [0, 24], sizes = [16, 8], strides = [1, 1]} : vector<16x128xbf16> to vector<16x8xbf16>
    %cst_26 = arith.constant dense<0.000000e+00> : vector<16x16xf32>
    %88 = tpu.matmul %86, %87, %cst_26 {dimension_numbers = #tpu.dot_dimension_numbers<[1], [1], [0], [0], [0, 0, 1, 0], [], []>} : vector<16x8xbf16>, vector<16x8xbf16>, vector<16x16xf32> -> vector<16x16xf32>
    %89 = arith.addf %88, %28 : vector<16x16xf32>
    %cst_27 = arith.constant dense<0xFF800000> : vector<16xf32>
    %90 = vector.multi_reduction <maximumf>, %89, %cst_27 [1] : vector<16x16xf32> to vector<16xf32>
    %91 = vector.shape_cast %90 : vector<16xf32> to vector<16x1xf32>
    %92 = vector.broadcast %91 : vector<16x1xf32> to vector<16x16xf32>
    %93 = arith.subf %89, %92 : vector<16x16xf32>
    %94 = math.exp %93 : vector<16x16xf32>
    %cst_28 = arith.constant dense<0.000000e+00> : vector<16xf32>
    %95 = vector.multi_reduction <add>, %94, %cst_28 [1] : vector<16x16xf32> to vector<16xf32>
    %96 = vector.shape_cast %95 : vector<16xf32> to vector<16x1xf32>
    %97 = tpu.reciprocal %96 {approx = true} : vector<16x1xf32> -> vector<16x1xf32>
    %98 = vector.broadcast %97 : vector<16x1xf32> to vector<16x16xf32>
    %99 = arith.mulf %94, %98 : vector<16x16xf32>
    %100 = arith.truncf %99 : vector<16x16xf32> to vector<16x16xbf16>
    %101 = vector.extract_strided_slice %31 {offsets = [0, 24], sizes = [16, 8], strides = [1, 1]} : vector<16x128xbf16> to vector<16x8xbf16>
    %cst_29 = arith.constant dense<0.000000e+00> : vector<16x8xf32>
    %102 = tpu.matmul %100, %101, %cst_29 {dimension_numbers = #tpu.dot_dimension_numbers<[1], [0], [0], [1], [0, 0, 1, 1], [], []>} : vector<16x16xbf16>, vector<16x8xbf16>, vector<16x8xf32> -> vector<16x8xf32>
    %c0_30 = arith.constant 0 : index
    %c24 = arith.constant 24 : index
    %103 = vector.load %arg8[%c0_30, %c24] : memref<16x32xf32, #tpu.memory_space<vmem>>, vector<16x8xf32>
    tpu.vector_store %arg8[%c0_30, %c24], %102 {strides = array<i32>} : memref<16x32xf32, #tpu.memory_space<vmem>>, vector<16x8xf32>,
    %c0_31 = arith.constant 0 : index
    %c0_32 = arith.constant 0 : index
    %104 = vector.load %arg8[%c0_31, %c0_32] : memref<16x32xf32, #tpu.memory_space<vmem>>, vector<16x32xf32>
    %105 = arith.truncf %104 : vector<16x32xf32> to vector<16x32xbf16>
    %c0_33 = arith.constant 0 : index
    %c0_34 = arith.constant 0 : index
    %106 = vector.load %arg5[%c0_33, %c0_34] : memref<32x32xbf16, #tpu.memory_space<vmem>>, vector<32x32xbf16>
    %cst_35 = arith.constant dense<0.000000e+00> : vector<16x32xf32>
    %107 = tpu.matmul %105, %106, %cst_35 {dimension_numbers = #tpu.dot_dimension_numbers<[1], [0], [0], [1], [0, 0, 1, 1], [], []>} : vector<16x32xbf16>, vector<32x32xbf16>, vector<16x32xf32> -> vector<16x32xf32>
    %c0_36 = arith.constant 0 : index
    %c0_37 = arith.constant 0 : index
    %108 = vector.load %arg6[%c0_36, %c0_37] : memref<1x32xf32, #tpu.memory_space<vmem>>, vector<1x32xf32>
    %109 = vector.broadcast %108 : vector<1x32xf32> to vector<16x32xf32>
    %110 = arith.addf %107, %109 : vector<16x32xf32>
    %c0_38 = arith.constant 0 : index
    %c0_39 = arith.constant 0 : index
    %111 = vector.load %arg7[%c0_38, %c0_39] : memref<16x32xf32, #tpu.memory_space<vmem>>, vector<16x32xf32>
    tpu.vector_store %arg7[%c0_38, %c0_39], %110 {strides = array<i32>} : memref<16x32xf32, #tpu.memory_space<vmem>>, vector<16x32xf32>,
    return
  }
  func.func @transform_0(%arg0: i32) -> (i32, i32) {
    %c0_i32 = arith.constant 0 : i32
    %c0_i32_0 = arith.constant 0 : i32
    return %arg0, %c0_i32 : i32, i32
  }
  func.func @transform_1(%arg0: i32) -> (i32, i32) {
    %c0_i32 = arith.constant 0 : i32
    %c0_i32_0 = arith.constant 0 : i32
    %c0_i32_1 = arith.constant 0 : i32
    return %c0_i32, %c0_i32_0 : i32, i32
  }
  func.func @transform_2(%arg0: i32) -> (i32, i32) {
    %c0_i32 = arith.constant 0 : i32
    %c0_i32_0 = arith.constant 0 : i32
    %c0_i32_1 = arith.constant 0 : i32
    return %c0_i32, %c0_i32_0 : i32, i32
  }
  func.func @transform_3(%arg0: i32) -> (i32, i32) {
    %c0_i32 = arith.constant 0 : i32
    %c0_i32_0 = arith.constant 0 : i32
    %c0_i32_1 = arith.constant 0 : i32
    return %c0_i32, %c0_i32_0 : i32, i32
  }
  func.func @transform_4(%arg0: i32) -> (i32, i32) {
    %c0_i32 = arith.constant 0 : i32
    %c0_i32_0 = arith.constant 0 : i32
    %c0_i32_1 = arith.constant 0 : i32
    return %c0_i32, %c0_i32_0 : i32, i32
  }
  func.func @transform_5(%arg0: i32) -> (i32, i32) {
    %c0_i32 = arith.constant 0 : i32
    %c0_i32_0 = arith.constant 0 : i32
    %c0_i32_1 = arith.constant 0 : i32
    return %c0_i32, %c0_i32_0 : i32, i32
  }
  func.func @transform_6(%arg0: i32) -> (i32, i32) {
    %c0_i32 = arith.constant 0 : i32
    %c0_i32_0 = arith.constant 0 : i32
    return %arg0, %c0_i32 : i32, i32
  }
}

</mosaic_0001>

<llo_original>
// kernel: tpu_custom_call.1
$region0: #{tpu_custom_call.1}
  #allocation0 [shape = 'u32[]', space=smem, size = 0x4, offset = 0x4, fixed_abs, tag = 'smem constant byte address 0x4 - core index']
  #allocation1 [shape = 'u32[144,128]{1,0:T(1,128)}', space=vmem, size = 0x12000, scoped, tag = 'internal scratch']
  #allocation2 [shape = 'f32[16,32]{1,0:T(8,128)}', space=vmem, size = 0x2000, scoped, tag = 'scratch operand']
  %s0 = inlined_call_operand.hbm [shape: f32[16,32], index: 0, kind: input, shape index: {}]
  %s1 = inlined_call_operand.hbm [shape: bf16[32,640], index: 1, kind: input, shape index: {}]
  %s2 = inlined_call_operand.vmem [shape: f32[1,640], index: 2, kind: input, shape index: {}]
  %s3 = inlined_call_operand.hbm [shape: f32[16,512], index: 3, kind: input, shape index: {}]
  %s4 = inlined_call_operand.hbm [shape: bf16[32,32], index: 4, kind: input, shape index: {}]
  %s5 = inlined_call_operand.vmem [shape: f32[1,32], index: 5, kind: input, shape index: {}]
  %s6 = inlined_call_operand.hbm [shape: f32[16,32], index: 6, kind: output, shape index: {}]
  %s7 = sld [smem:[#allocation0]]
  $region50: #{tpu_custom_call.1} parent=0
    _
  %s9 = ssub.s32 1, %s7
  %s10 = scalar_select 0, %s9, %s7
  $region1: #{tpu_custom_call.1} parent=0
    #allocation3 [shape = 'u8[8192]{0}', space=vmem, size = 0x2000, scoped, tag = 'input window, operand 0, single buffered']
    #allocation4 [shape = 's32[1]{0}', space=sflag, size = 0x4, scoped, tag = 'scoped memory for tpu_custom_call.1']
    #allocation5 [shape = 's32[1]{0}', space=sflag, size = 0x4, scoped, tag = 'scoped memory for tpu_custom_call.1']
    #allocation6 [shape = 'u8[40960]{0}', space=vmem, size = 0xa000, scoped, tag = 'input window, operand 1, single buffered']
    #allocation7 [shape = 's32[1]{0}', space=sflag, size = 0x4, scoped, tag = 'scoped memory for tpu_custom_call.1']
    #allocation8 [shape = 'u8[32768]{0}', space=vmem, size = 0x8000, scoped, tag = 'input window, operand 3, single buffered']
    #allocation9 [shape = 'u8[8192]{0}', space=vmem, size = 0x2000, scoped, tag = 'input window, operand 4, single buffered']
    #allocation10 [shape = 's32[1]{0}', space=sflag, size = 0x4, scoped, tag = 'scoped memory for tpu_custom_call.1']
    #allocation11 [shape = 'u8[8192]{0}', space=vmem, size = 0x2000, scoped, tag = 'output window, operand 0, single buffered']
    %11 = vsyncpa [#allocation4], 0
    %12 = vsyncpa [#allocation7], 0
    %13 = vsyncpa [#allocation10], 0
    %14 = vsyncpa [#allocation5], 0
    // Predicated region
    $region2: #{tpu_custom_call.1} parent=1 // pred_check
      _
    $region3: #{tpu_custom_call.1} parent=1 // pred_check_branch
      %16 = sbr.rel (0) target = $region5
    $region4: #{tpu_custom_call.1} parent=1 // pred_region
      %s18 = ssub.s32 256, 256
      %19 = vsyncadd [#allocation4], %s18
      %s20 = sshll.u32 [#allocation3], 4
      %s21 = int_to_ptr.vmem [resolvable:$true] %s20
      %26 = dma.hbm_to_vmem [thread:$0]  %s0, 256, %s21, [#allocation4], 128, 128, 8
    $region5: #{tpu_custom_call.1} parent=1 // pred_fallthru
      _
    // Predicated region
    $region6: #{tpu_custom_call.1} parent=1 // pred_check
      _
    $region7: #{tpu_custom_call.1} parent=1 // pred_check_branch
      %28 = sbr.rel (0) target = $region9
    $region8: #{tpu_custom_call.1} parent=1 // pred_region
      %s30 = ssub.s32 1280, 1280
      %31 = vsyncadd [#allocation7], %s30
      %s32 = sshll.u32 [#allocation6], 4
      %s33 = int_to_ptr.vmem [resolvable:$true] %s32
      %38 = dma.hbm_to_vmem [thread:$0]  %s1, 1280, %s33, [#allocation7], 320, 320, 20
    $region9: #{tpu_custom_call.1} parent=1 // pred_fallthru
      _
    // Predicated region
    $region10: #{tpu_custom_call.1} parent=1 // pred_check
      _
    $region11: #{tpu_custom_call.1} parent=1 // pred_check_branch
      %40 = sbr.rel (0) target = $region13
    $region12: #{tpu_custom_call.1} parent=1 // pred_region
      _
    $region13: #{tpu_custom_call.1} parent=1 // pred_fallthru
      _
    // Predicated region
    $region14: #{tpu_custom_call.1} parent=1 // pred_check
      _
    $region15: #{tpu_custom_call.1} parent=1 // pred_check_branch
      %42 = sbr.rel (0) target = $region17
    $region16: #{tpu_custom_call.1} parent=1 // pred_region
      %s44 = ssub.s32 1024, 1024
      %45 = vsyncadd [#allocation7], %s44
      %s46 = sshll.u32 [#allocation8], 4
      %s47 = int_to_ptr.vmem [resolvable:$true] %s46
      %52 = dma.hbm_to_vmem [thread:$0]  %s3, 1024, %s47, [#allocation7], 512, 512, 32
    $region17: #{tpu_custom_call.1} parent=1 // pred_fallthru
      _
    // Predicated region
    $region18: #{tpu_custom_call.1} parent=1 // pred_check
      _
    $region19: #{tpu_custom_call.1} parent=1 // pred_check_branch
      %54 = sbr.rel (0) target = $region21
    $region20: #{tpu_custom_call.1} parent=1 // pred_region
      %s56 = ssub.s32 256, 256
      %57 = vsyncadd [#allocation10], %s56
      %s58 = sshll.u32 [#allocation9], 4
      %s59 = int_to_ptr.vmem [resolvable:$true] %s58
      %64 = dma.hbm_to_vmem [thread:$0]  %s4, 256, %s59, [#allocation10], 64, 64, 4
    $region21: #{tpu_custom_call.1} parent=1 // pred_fallthru
      _
    // Predicated region
    $region22: #{tpu_custom_call.1} parent=1 // pred_check
      _
    $region23: #{tpu_custom_call.1} parent=1 // pred_check_branch
      %66 = sbr.rel (0) target = $region25
    $region24: #{tpu_custom_call.1} parent=1 // pred_region
      _
    $region25: #{tpu_custom_call.1} parent=1 // pred_fallthru
      _
    // Predicated region
    $region26: #{tpu_custom_call.1} parent=1 // pred_check
      _
    $region27: #{tpu_custom_call.1} parent=1 // pred_check_branch
      %68 = sbr.rel (0) target = $region29
    $region28: #{tpu_custom_call.1} parent=1 // pred_region
      %69 = dma.done [#allocation4], 256
    $region29: #{tpu_custom_call.1} parent=1 // pred_fallthru
      _
    // Predicated region
    $region30: #{tpu_custom_call.1} parent=1 // pred_check
      _
    $region31: #{tpu_custom_call.1} parent=1 // pred_check_branch
      %71 = sbr.rel (0) target = $region33
    $region32: #{tpu_custom_call.1} parent=1 // pred_region
      %72 = dma.done [#allocation7], 1280
    $region33: #{tpu_custom_call.1} parent=1 // pred_fallthru
      _
    // Predicated region
    $region34: #{tpu_custom_call.1} parent=1 // pred_check
      _
    $region35: #{tpu_custom_call.1} parent=1 // pred_check_branch
      %74 = sbr.rel (0) target = $region37
    $region36: #{tpu_custom_call.1} parent=1 // pred_region
      %75 = dma.done [#allocation7], 1024
    $region37: #{tpu_custom_call.1} parent=1 // pred_fallthru
      _
    // Predicated region
    $region38: #{tpu_custom_call.1} parent=1 // pred_check
      _
    $region39: #{tpu_custom_call.1} parent=1 // pred_check_branch
      %77 = sbr.rel (0) target = $region41
    $region40: #{tpu_custom_call.1} parent=1 // pred_region
      %78 = dma.done [#allocation10], 256
    $region41: #{tpu_custom_call.1} parent=1 // pred_fallthru
      _
    %v80 = vld [vmem:[#allocation3] sm:$0xff]
    %v81 = vld [vmem:[#allocation3 + $0x8] sm:$0xff]
    %v82 = vpack.c.bf16 %v81, %v80
    %v83 = vld [vmem:[#allocation6] sm:$0xff]
    %v84 = vld [vmem:[#allocation6 + $0x8] sm:$0xff]
    %v85 = vld [vmem:[#allocation6 + $0x10] sm:$0xf]
    %v86 = vld [vmem:[#allocation6 + $0x14] sm:$0xff]
    %v87 = vld [vmem:[#allocation6 + $0x1c] sm:$0xff]
    %v88 = vld [vmem:[#allocation6 + $0x24] sm:$0xf]
    %v89 = vld [vmem:[#allocation6 + $0x28] sm:$0xff]
    %v90 = vld [vmem:[#allocation6 + $0x30] sm:$0xff]
    %v91 = vld [vmem:[#allocation6 + $0x38] sm:$0xf]
    %v92 = vld [vmem:[#allocation6 + $0x3c] sm:$0xff]
    %v93 = vld [vmem:[#allocation6 + $0x44] sm:$0xff]
    %v94 = vld [vmem:[#allocation6 + $0x4c] sm:$0xf]
    %v95 = vld [vmem:[%s2] sm:$0x1f]
    %v97 = vlaneseq
    %v98 = vshrl.u32 %v97, 7
    %v99 = vsub.s32 0, %v98
    %v100 = vrot.slane %v95, %v99
    %v101 = vlaneseq
    %v102 = vshrl.u32 %v101, 7
    %v103 = vsub.s32 1, %v102
    %v104 = vrot.slane %v95, %v103
    %v105 = vlaneseq
    %v106 = vshrl.u32 %v105, 7
    %v107 = vsub.s32 2, %v106
    %v108 = vrot.slane %v95, %v107
    %v109 = vlaneseq
    %v110 = vshrl.u32 %v109, 7
    %v111 = vsub.s32 3, %v110
    %v112 = vrot.slane %v95, %v111
    %v113 = vlaneseq
    %v114 = vshrl.u32 %v113, 7
    %v115 = vsub.s32 4, %v114
    %v116 = vrot.slane %v95, %v115
    %v134 = vunpack.c.l.b16 %v83
    %v135 = vunpack.c.h.b16 %v83
    %v136 = vunpack.c.l.b16 %v84
    %v137 = vunpack.c.h.b16 %v84
    %v138 = vunpack.c.l.b16 %v85
    %v139 = vunpack.c.l.b16 %v86
    %v140 = vunpack.c.h.b16 %v86
    %v141 = vunpack.c.l.b16 %v87
    %v142 = vunpack.c.h.b16 %v87
    %v143 = vunpack.c.l.b16 %v88
    %v144 = vunpack.c.l.b16 %v89
    %v145 = vunpack.c.h.b16 %v89
    %v146 = vunpack.c.l.b16 %v90
    %v147 = vunpack.c.h.b16 %v90
    %v148 = vunpack.c.l.b16 %v91
    %v149 = vunpack.c.l.b16 %v92
    %v150 = vunpack.c.h.b16 %v92
    %v151 = vunpack.c.l.b16 %v93
    %v152 = vunpack.c.h.b16 %v93
    %v153 = vunpack.c.l.b16 %v94
    %v154 = vpack.c.b16 %v139, %v134
    %v155 = vpack.c.b16 %v140, %v135
    %v156 = vpack.c.b16 %v141, %v136
    %v157 = vpack.c.b16 %v142, %v137
    %v158 = vpack.c.b16 %v143, %v138
    %v159 = vpack.c.b16 %v149, %v144
    %v160 = vpack.c.b16 %v150, %v145
    %v161 = vpack.c.b16 %v151, %v146
    %v162 = vpack.c.b16 %v152, %v147
    %v163 = vpack.c.b16 %v153, %v148
    %vm174 = vcmask 261120
    %v176 = vsel %vm174, %v82, 0
    %178 = vmatprep.subr.bf16.mxu0 %v155
    %179 = vmatpush1.bf16.msra.mxu0 %v154
    %180 = vmatprep.subr.bf16.mxu0 %v160
    %181 = vmatpush1.bf16.msra.mxu0 %v159
    %182 = vmatprep.subr.bf16.mxu0 0
    %183 = vmatpush1.bf16.msra.mxu0 0
    %184 = vmatprep.subr.bf16.mxu0 0
    %185 = vmatpush1.bf16.msra.mxu0 0
    %186 = vmatprep.subr.bf16.mxu0 0
    %187 = vmatpush1.bf16.msra.mxu0 0
    %188 = vmatprep.subr.bf16.mxu0 0
    %189 = vmatpush1.bf16.msra.mxu0 0
    %190 = vmatprep.subr.bf16.mxu0 0
    %191 = vmatpush1.bf16.msra.mxu0 0
    %192 = vmatprep.subr.bf16.mxu0 0
    %193 = vmatpush1.bf16.msra.mxu0 0
    %194 = vmatprep.subr.bf16.mxu0 0
    %195 = vmatpush1.bf16.msra.mxu0 0
    %196 = vmatprep.subr.bf16.mxu0 0
    %197 = vmatpush1.bf16.msra.mxu0 0
    %198 = vmatprep.subr.bf16.mxu0 0
    %199 = vmatpush1.bf16.msra.mxu0 0
    %200 = vmatprep.subr.bf16.mxu0 0
    %201 = vmatpush1.bf16.msra.mxu0 0
    %202 = vmatprep.subr.bf16.mxu0 0
    %203 = vmatpush1.bf16.msra.mxu0 0
    %204 = vmatprep.subr.bf16.mxu0 0
    %205 = vmatpush1.bf16.msra.mxu0 0
    %206 = vmatprep.subr.bf16.mxu0 0
    %207 = vmatpush1.bf16.msra.mxu0 0
    %208 = vmatprep.subr.bf16.mxu0 0
    %209 = vmatpush1.bf16.msra.mxu0 0
    %210 = vmatprep.mubr.bf16.mxu0 0
    %211 = vmatmul.mubr.bf16.gmra.mrb[0].mxu0 %v176
    %v212 = vpop.f32.mrb[0].mxu0
    %v213 = vadd.f32 %v100, %v212
    %v214 = vpop.f32.mrb[0].mxu0
    %v215 = vadd.f32 %v104, %v214
    %v216 = vpop.f32.mrb[0].mxu0
    %v217 = vadd.f32 %v100, %v216
    %v218 = vpop.f32.mrb[0].mxu0
    %v219 = vadd.f32 %v104, %v218
    %220 = vdwg.mxu0
    %221 = vmatprep.subr.bf16.mxu0 %v157
    %222 = vmatpush1.bf16.msra.mxu0 %v156
    %223 = vmatprep.subr.bf16.mxu0 %v162
    %224 = vmatpush1.bf16.msra.mxu0 %v161
    %225 = vmatprep.subr.bf16.mxu0 0
    %226 = vmatpush1.bf16.msra.mxu0 0
    %227 = vmatprep.subr.bf16.mxu0 0
    %228 = vmatpush1.bf16.msra.mxu0 0
    %229 = vmatprep.subr.bf16.mxu0 0
    %230 = vmatpush1.bf16.msra.mxu0 0
    %231 = vmatprep.subr.bf16.mxu0 0
    %232 = vmatpush1.bf16.msra.mxu0 0
    %233 = vmatprep.subr.bf16.mxu0 0
    %234 = vmatpush1.bf16.msra.mxu0 0
    %235 = vmatprep.subr.bf16.mxu0 0
    %236 = vmatpush1.bf16.msra.mxu0 0
    %237 = vmatprep.subr.bf16.mxu0 0
    %238 = vmatpush1.bf16.msra.mxu0 0
    %239 = vmatprep.subr.bf16.mxu0 0
    %240 = vmatpush1.bf16.msra.mxu0 0
    %241 = vmatprep.subr.bf16.mxu0 0
    %242 = vmatpush1.bf16.msra.mxu0 0
    %243 = vmatprep.subr.bf16.mxu0 0
    %244 = vmatpush1.bf16.msra.mxu0 0
    %245 = vmatprep.subr.bf16.mxu0 0
    %246 = vmatpush1.bf16.msra.mxu0 0
    %247 = vmatprep.subr.bf16.mxu0 0
    %248 = vmatpush1.bf16.msra.mxu0 0
    %249 = vmatprep.subr.bf16.mxu0 0
    %250 = vmatpush1.bf16.msra.mxu0 0
    %251 = vmatprep.subr.bf16.mxu0 0
    %252 = vmatpush1.bf16.msra.mxu0 0
    %253 = vmatprep.mubr.bf16.mxu0 0
    %254 = vmatmul.mubr.bf16.gmra.mrb[0].mxu0 %v176
    %v255 = vpop.f32.mrb[0].mxu0
    %v256 = vadd.f32 %v108, %v255
    %v257 = vpop.f32.mrb[0].mxu0
    %v258 = vadd.f32 %v112, %v257
    %v259 = vpop.f32.mrb[0].mxu0
    %v260 = vadd.f32 %v108, %v259
    %v261 = vpop.f32.mrb[0].mxu0
    %v262 = vadd.f32 %v112, %v261
    %263 = vdwg.mxu0
    %264 = vmatprep.subr.bf16.mxu0 0
    %265 = vmatpush1.bf16.msra.mxu0 %v158
    %266 = vmatprep.subr.bf16.mxu0 0
    %267 = vmatpush1.bf16.msra.mxu0 %v163
    %268 = vmatprep.subr.bf16.mxu0 0
    %269 = vmatpush1.bf16.msra.mxu0 0
    %270 = vmatprep.subr.bf16.mxu0 0
    %271 = vmatpush1.bf16.msra.mxu0 0
    %272 = vmatprep.subr.bf16.mxu0 0
    %273 = vmatpush1.bf16.msra.mxu0 0
    %274 = vmatprep.subr.bf16.mxu0 0
    %275 = vmatpush1.bf16.msra.mxu0 0
    %276 = vmatprep.subr.bf16.mxu0 0
    %277 = vmatpush1.bf16.msra.mxu0 0
    %278 = vmatprep.subr.bf16.mxu0 0
    %279 = vmatpush1.bf16.msra.mxu0 0
    %280 = vmatprep.subr.bf16.mxu0 0
    %281 = vmatpush1.bf16.msra.mxu0 0
    %282 = vmatprep.subr.bf16.mxu0 0
    %283 = vmatpush1.bf16.msra.mxu0 0
    %284 = vmatprep.subr.bf16.mxu0 0
    %285 = vmatpush1.bf16.msra.mxu0 0
    %286 = vmatprep.subr.bf16.mxu0 0
    %287 = vmatpush1.bf16.msra.mxu0 0
    %288 = vmatprep.subr.bf16.mxu0 0
    %289 = vmatpush1.bf16.msra.mxu0 0
    %290 = vmatprep.subr.bf16.mxu0 0
    %291 = vmatpush1.bf16.msra.mxu0 0
    %292 = vmatprep.subr.bf16.mxu0 0
    %293 = vmatpush1.bf16.msra.mxu0 0
    %294 = vmatprep.subr.bf16.mxu0 0
    %295 = vmatpush1.bf16.msra.mxu0 0
    %296 = vmatprep.mubr.bf16.mxu0 0
    %297 = vmatmul.mubr.bf16.gmra.mrb[0].mxu0 %v176
    %v298 = vpop.f32.mrb[0].mxu0
    %v299 = vadd.f32 %v116, %v298
    %v300 = vpop.f32.mrb[0].mxu0
    %v301 = vpop.f32.mrb[0].mxu0
    %v302 = vadd.f32 %v116, %v301
    %v303 = vpop.f32.mrb[0].mxu0
    %304 = vdwg.mxu0
    %v305 = vld [vmem:[#allocation8] sm:$0xff]
    %v306 = vld [vmem:[#allocation8 + $0x8] sm:$0xff]
    %v307 = vld [vmem:[#allocation8 + $0x10] sm:$0xff]
    %v308 = vld [vmem:[#allocation8 + $0x18] sm:$0xff]
    %v309 = vld [vmem:[#allocation8 + $0x20] sm:$0xff]
    %v310 = vld [vmem:[#allocation8 + $0x28] sm:$0xff]
    %v311 = vld [vmem:[#allocation8 + $0x30] sm:$0xff]
    %v312 = vld [vmem:[#allocation8 + $0x38] sm:$0xff]
    %v313 = vmul.f32 %v213, %v305
    %v314 = vmul.f32 %v215, %v306
    %v315 = vmul.f32 %v256, %v307
    %v316 = vmul.f32 %v258, %v308
    %v317 = vmul.f32 %v217, %v309
    %v318 = vmul.f32 %v219, %v310
    %v319 = vmul.f32 %v260, %v311
    %v320 = vmul.f32 %v262, %v312
    %v321 = vadd.f32 %v313, %v314
    %v322 = vadd.f32 %v317, %v318
    %v323 = vadd.f32 %v315, %v316
    %v324 = vadd.f32 %v319, %v320
    %v325 = vlaneseq
    %v326 = vshrl.u32 %v325, 7
    %v327 = vadd.s32 %v326, 8
    %v328 = vlaneseq
    %v329 = vand.u32 %v328, 127
    %v330 = vshra.s32 %v326, 3
    %v331 = vshra.s32 %v327, 3
    %v332 = vshra.s32 %v329, 3
    %vm333 = vcmp.eq.s32.totalorder %v330, %v332
    %vm334 = vcmp.eq.s32.totalorder %v331, %v332
    %vm335 = vcmp.le.s32.totalorder %v329, %v326
    %vm336 = vcmp.le.s32.totalorder %v329, %v327
    %vm337 = vmand %vm333, %vm335
    %vm338 = vmand %vm334, %vm336
    %v339 = vsel %vm337, 0.0, -1e+30
    %v340 = vsel %vm338, 0.0, -1e+30
    %v341 = vpack.c.bf16 %v322, %v321
    %v342 = vpack.c.bf16 %v324, %v323
    %v343 = vpack.c.bf16 %v302, %v299
    %vm344 = vcmask 64512
    %v346 = vsel %vm344, %v341, 0
    %v349 = vsel %vm344, %v342, 0
    %351 = vmatprep.subr.bf16.mxu0 0
    %352 = vmatpush1.bf16.xpose.msra.mxu0 %v349
    %353 = vmatprep.subr.bf16.mxu0 0
    %354 = vmatpush1.bf16.xpose.msra.mxu0 0
    %355 = vmatprep.subr.bf16.mxu0 0
    %356 = vmatpush1.bf16.xpose.msra.mxu0 0
    %357 = vmatprep.subr.bf16.mxu0 0
    %358 = vmatpush1.bf16.xpose.msra.mxu0 0
    %359 = vmatprep.subr.bf16.mxu0 0
    %360 = vmatpush1.bf16.xpose.msra.mxu0 0
    %361 = vmatprep.subr.bf16.mxu0 0
    %362 = vmatpush1.bf16.xpose.msra.mxu0 0
    %363 = vmatprep.subr.bf16.mxu0 0
    %364 = vmatpush1.bf16.xpose.msra.mxu0 0
    %365 = vmatprep.subr.bf16.mxu0 0
    %366 = vmatpush1.bf16.xpose.msra.mxu0 0
    %367 = vmatprep.subr.bf16.mxu0 0
    %368 = vmatpush1.bf16.xpose.msra.mxu0 0
    %369 = vmatprep.subr.bf16.mxu0 0
    %370 = vmatpush1.bf16.xpose.msra.mxu0 0
    %371 = vmatprep.subr.bf16.mxu0 0
    %372 = vmatpush1.bf16.xpose.msra.mxu0 0
    %373 = vmatprep.subr.bf16.mxu0 0
    %374 = vmatpush1.bf16.xpose.msra.mxu0 0
    %375 = vmatprep.subr.bf16.mxu0 0
    %376 = vmatpush1.bf16.xpose.msra.mxu0 0
    %377 = vmatprep.subr.bf16.mxu0 0
    %378 = vmatpush1.bf16.xpose.msra.mxu0 0
    %379 = vmatprep.subr.bf16.mxu0 0
    %380 = vmatpush1.bf16.xpose.msra.mxu0 0
    %381 = vmatprep.subr.bf16.mxu0 0
    %382 = vmatpush1.bf16.xpose.msra.mxu0 0
    %383 = vmatprep.mubr.bf16.mxu0 0
    %384 = vmatmul.mubr.bf16.gmra.mrb[0].mxu0 %v346
    %v385 = vpop.f32.mrb[0].mxu0
    %v386 = vadd.f32 %v339, %v385
    %v387 = vpop.f32.mrb[0].mxu0
    %v388 = vpop.f32.mrb[0].mxu0
    %v389 = vadd.f32 %v340, %v388
    %v390 = vpop.f32.mrb[0].mxu0
    %391 = vdwg.mxu0
    %vm392 = vcmask 130048
    %v393 = vsel %vm392, %v386, -inf
    %394 = vmax.xlane.f32.xlu0 %v393
    %v395 = vpop.xlane.xlu0 %394
    %v396 = vsel %vm392, %v389, -inf
    %397 = vmax.xlane.f32.xlu0 %v396
    %v398 = vpop.xlane.xlu0 %397
    %v399 = vsub.f32 %v386, %v395
    %v400 = vsub.f32 %v389, %v398
    %v401 = vmul.f32 %v399, 1.442695
    %v402 = vpow.pop %v401
    %v403 = vmul.f32 %v400, 1.442695
    %v404 = vpow.pop %v403
    %v405 = vsel %vm392, %v402, 0.0
    %406 = vadd.xlane.f32.xlu0 %v405
    %v407 = vpop.xlane.xlu0 %406
    %v408 = vsel %vm392, %v404, 0.0
    %409 = vadd.xlane.f32.xlu0 %v408
    %v410 = vpop.xlane.xlu0 %409
    %v411 = vrcp.pop %v407
    %v412 = vrcp.pop %v410
    %v413 = vmul.f32 %v402, %v411
    %v414 = vmul.f32 %v404, %v412
    %v415 = vpack.c.bf16 %v414, %v413
    %v417 = vsel %vm392, %v415, 0
    %419 = vmatprep.subr.bf16.mxu0 0
    %420 = vmatpush1.bf16.msra.mxu0 %v343
    %421 = vmatprep.subr.bf16.mxu0 0
    %422 = vmatpush1.bf16.msra.mxu0 0
    %423 = vmatprep.subr.bf16.mxu0 0
    %424 = vmatpush1.bf16.msra.mxu0 0
    %425 = vmatprep.subr.bf16.mxu0 0
    %426 = vmatpush1.bf16.msra.mxu0 0
    %427 = vmatprep.subr.bf16.mxu0 0
    %428 = vmatpush1.bf16.msra.mxu0 0
    %429 = vmatprep.subr.bf16.mxu0 0
    %430 = vmatpush1.bf16.msra.mxu0 0
    %431 = vmatprep.subr.bf16.mxu0 0
    %432 = vmatpush1.bf16.msra.mxu0 0
    %433 = vmatprep.subr.bf16.mxu0 0
    %434 = vmatpush1.bf16.msra.mxu0 0
    %435 = vmatprep.subr.bf16.mxu0 0
    %436 = vmatpush1.bf16.msra.mxu0 0
    %437 = vmatprep.subr.bf16.mxu0 0
    %438 = vmatpush1.bf16.msra.mxu0 0
    %439 = vmatprep.subr.bf16.mxu0 0
    %440 = vmatpush1.bf16.msra.mxu0 0
    %441 = vmatprep.subr.bf16.mxu0 0
    %442 = vmatpush1.bf16.msra.mxu0 0
    %443 = vmatprep.subr.bf16.mxu0 0
    %444 = vmatpush1.bf16.msra.mxu0 0
    %445 = vmatprep.subr.bf16.mxu0 0
    %446 = vmatpush1.bf16.msra.mxu0 0
    %447 = vmatprep.subr.bf16.mxu0 0
    %448 = vmatpush1.bf16.msra.mxu0 0
    %449 = vmatprep.subr.bf16.mxu0 0
    %450 = vmatpush1.bf16.msra.mxu0 0
    %451 = vmatprep.mubr.bf16.mxu0 0
    %452 = vmatmul.mubr.bf16.gmra.mrb[0].mxu0 %v417
    %v453 = vpop.f32.mrb[0].mxu0
    %v454 = vadd.f32 0.0, %v453
    %v455 = vpop.f32.mrb[0].mxu0
    %v456 = vpop.f32.mrb[0].mxu0
    %v457 = vadd.f32 0.0, %v456
    %v458 = vpop.f32.mrb[0].mxu0
    %459 = vdwg.mxu0
    %460 = vst.msk [vmem:[#allocation2] sm:$0xff] %vm344, %v454
    %461 = vst.msk [vmem:[#allocation2 + $0x8] sm:$0xff] %vm344, %v457
    %463 = vrot.lane.b32.xlu0 %v341, 120
    %v464 = vpop.permute.xlu0 %463
    %466 = vrot.lane.b32.xlu0 %v342, 120
    %v467 = vpop.permute.xlu0 %466
    %v469 = vsel %vm344, %v464, 0
    %v472 = vsel %vm344, %v467, 0
    %474 = vmatprep.subr.bf16.mxu0 0
    %475 = vmatpush1.bf16.xpose.msra.mxu0 %v472
    %476 = vmatprep.subr.bf16.mxu0 0
    %477 = vmatpush1.bf16.xpose.msra.mxu0 0
    %478 = vmatprep.subr.bf16.mxu0 0
    %479 = vmatpush1.bf16.xpose.msra.mxu0 0
    %480 = vmatprep.subr.bf16.mxu0 0
    %481 = vmatpush1.bf16.xpose.msra.mxu0 0
    %482 = vmatprep.subr.bf16.mxu0 0
    %483 = vmatpush1.bf16.xpose.msra.mxu0 0
    %484 = vmatprep.subr.bf16.mxu0 0
    %485 = vmatpush1.bf16.xpose.msra.mxu0 0
    %486 = vmatprep.subr.bf16.mxu0 0
    %487 = vmatpush1.bf16.xpose.msra.mxu0 0
    %488 = vmatprep.subr.bf16.mxu0 0
    %489 = vmatpush1.bf16.xpose.msra.mxu0 0
    %490 = vmatprep.subr.bf16.mxu0 0
    %491 = vmatpush1.bf16.xpose.msra.mxu0 0
    %492 = vmatprep.subr.bf16.mxu0 0
    %493 = vmatpush1.bf16.xpose.msra.mxu0 0
    %494 = vmatprep.subr.bf16.mxu0 0
    %495 = vmatpush1.bf16.xpose.msra.mxu0 0
    %496 = vmatprep.subr.bf16.mxu0 0
    %497 = vmatpush1.bf16.xpose.msra.mxu0 0
    %498 = vmatprep.subr.bf16.mxu0 0
    %499 = vmatpush1.bf16.xpose.msra.mxu0 0
    %500 = vmatprep.subr.bf16.mxu0 0
    %501 = vmatpush1.bf16.xpose.msra.mxu0 0
    %502 = vmatprep.subr.bf16.mxu0 0
    %503 = vmatpush1.bf16.xpose.msra.mxu0 0
    %504 = vmatprep.subr.bf16.mxu0 0
    %505 = vmatpush1.bf16.xpose.msra.mxu0 0
    %506 = vmatprep.mubr.bf16.mxu0 0
    %507 = vmatmul.mubr.bf16.gmra.mrb[0].mxu0 %v469
    %v508 = vpop.f32.mrb[0].mxu0
    %v509 = vadd.f32 %v339, %v508
    %v510 = vpop.f32.mrb[0].mxu0
    %v511 = vpop.f32.mrb[0].mxu0
    %v512 = vadd.f32 %v340, %v511
    %v513 = vpop.f32.mrb[0].mxu0
    %514 = vdwg.mxu0
    %v515 = vsel %vm392, %v509, -inf
    %516 = vmax.xlane.f32.xlu0 %v515
    %v517 = vpop.xlane.xlu0 %516
    %v518 = vsel %vm392, %v512, -inf
    %519 = vmax.xlane.f32.xlu0 %v518
    %v520 = vpop.xlane.xlu0 %519
    %v521 = vsub.f32 %v509, %v517
    %v522 = vsub.f32 %v512, %v520
    %v523 = vmul.f32 %v521, 1.442695
    %v524 = vpow.pop %v523
    %v525 = vmul.f32 %v522, 1.442695
    %v526 = vpow.pop %v525
    %v527 = vsel %vm392, %v524, 0.0
    %528 = vadd.xlane.f32.xlu0 %v527
    %v529 = vpop.xlane.xlu0 %528
    %v530 = vsel %vm392, %v526, 0.0
    %531 = vadd.xlane.f32.xlu0 %v530
    %v532 = vpop.xlane.xlu0 %531
    %v533 = vrcp.pop %v529
    %v534 = vrcp.pop %v532
    %v535 = vmul.f32 %v524, %v533
    %v536 = vmul.f32 %v526, %v534
    %v537 = vpack.c.bf16 %v536, %v535
    %539 = vrot.lane.b32.xlu0 %v343, 120
    %v540 = vpop.permute.xlu0 %539
    %v543 = vsel %vm392, %v537, 0
    %545 = vmatprep.subr.bf16.mxu0 0
    %546 = vmatpush1.bf16.msra.mxu0 %v540
    %547 = vmatprep.subr.bf16.mxu0 0
    %548 = vmatpush1.bf16.msra.mxu0 0
    %549 = vmatprep.subr.bf16.mxu0 0
    %550 = vmatpush1.bf16.msra.mxu0 0
    %551 = vmatprep.subr.bf16.mxu0 0
    %552 = vmatpush1.bf16.msra.mxu0 0
    %553 = vmatprep.subr.bf16.mxu0 0
    %554 = vmatpush1.bf16.msra.mxu0 0
    %555 = vmatprep.subr.bf16.mxu0 0
    %556 = vmatpush1.bf16.msra.mxu0 0
    %557 = vmatprep.subr.bf16.mxu0 0
    %558 = vmatpush1.bf16.msra.mxu0 0
    %559 = vmatprep.subr.bf16.mxu0 0
    %560 = vmatpush1.bf16.msra.mxu0 0
    %561 = vmatprep.subr.bf16.mxu0 0
    %562 = vmatpush1.bf16.msra.mxu0 0
    %563 = vmatprep.subr.bf16.mxu0 0
    %564 = vmatpush1.bf16.msra.mxu0 0
    %565 = vmatprep.subr.bf16.mxu0 0
    %566 = vmatpush1.bf16.msra.mxu0 0
    %567 = vmatprep.subr.bf16.mxu0 0
    %568 = vmatpush1.bf16.msra.mxu0 0
    %569 = vmatprep.subr.bf16.mxu0 0
    %570 = vmatpush1.bf16.msra.mxu0 0
    %571 = vmatprep.subr.bf16.mxu0 0
    %572 = vmatpush1.bf16.msra.mxu0 0
    %573 = vmatprep.subr.bf16.mxu0 0
    %574 = vmatpush1.bf16.msra.mxu0 0
    %575 = vmatprep.subr.bf16.mxu0 0
    %576 = vmatpush1.bf16.msra.mxu0 0
    %577 = vmatprep.mubr.bf16.mxu0 0
    %578 = vmatmul.mubr.bf16.gmra.mrb[0].mxu0 %v543
    %v579 = vpop.f32.mrb[0].mxu0
    %v580 = vadd.f32 0.0, %v579
    %v581 = vpop.f32.mrb[0].mxu0
    %v582 = vpop.f32.mrb[0].mxu0
    %v583 = vadd.f32 0.0, %v582
    %v584 = vpop.f32.mrb[0].mxu0
    %585 = vdwg.mxu0
    %588 = vrot.lane.b32.xlu0 %v580, 8
    %v589 = vpop.permute.xlu0 %588
    %590 = vrot.lane.b32.xlu0 %v583, 8
    %v591 = vpop.permute.xlu0 %590
    %vm594 = vcmask 130112
    %595 = vst.msk [vmem:[#allocation2] sm:$0xff] %vm594, %v589
    %596 = vst.msk [vmem:[#allocation2 + $0x8] sm:$0xff] %vm594, %v591
    %597 = vrot.lane.b32.xlu0 %v341, 112
    %v598 = vpop.permute.xlu0 %597
    %599 = vrot.lane.b32.xlu0 %v342, 112
    %v600 = vpop.permute.xlu0 %599
    %v602 = vsel %vm344, %v598, 0
    %v605 = vsel %vm344, %v600, 0
    %607 = vmatprep.subr.bf16.mxu0 0
    %608 = vmatpush1.bf16.xpose.msra.mxu0 %v605
    %609 = vmatprep.subr.bf16.mxu0 0
    %610 = vmatpush1.bf16.xpose.msra.mxu0 0
    %611 = vmatprep.subr.bf16.mxu0 0
    %612 = vmatpush1.bf16.xpose.msra.mxu0 0
    %613 = vmatprep.subr.bf16.mxu0 0
    %614 = vmatpush1.bf16.xpose.msra.mxu0 0
    %615 = vmatprep.subr.bf16.mxu0 0
    %616 = vmatpush1.bf16.xpose.msra.mxu0 0
    %617 = vmatprep.subr.bf16.mxu0 0
    %618 = vmatpush1.bf16.xpose.msra.mxu0 0
    %619 = vmatprep.subr.bf16.mxu0 0
    %620 = vmatpush1.bf16.xpose.msra.mxu0 0
    %621 = vmatprep.subr.bf16.mxu0 0
    %622 = vmatpush1.bf16.xpose.msra.mxu0 0
    %623 = vmatprep.subr.bf16.mxu0 0
    %624 = vmatpush1.bf16.xpose.msra.mxu0 0
    %625 = vmatprep.subr.bf16.mxu0 0
    %626 = vmatpush1.bf16.xpose.msra.mxu0 0
    %627 = vmatprep.subr.bf16.mxu0 0
    %628 = vmatpush1.bf16.xpose.msra.mxu0 0
    %629 = vmatprep.subr.bf16.mxu0 0
    %630 = vmatpush1.bf16.xpose.msra.mxu0 0
    %631 = vmatprep.subr.bf16.mxu0 0
    %632 = vmatpush1.bf16.xpose.msra.mxu0 0
    %633 = vmatprep.subr.bf16.mxu0 0
    %634 = vmatpush1.bf16.xpose.msra.mxu0 0
    %635 = vmatprep.subr.bf16.mxu0 0
    %636 = vmatpush1.bf16.xpose.msra.mxu0 0
    %637 = vmatprep.subr.bf16.mxu0 0
    %638 = vmatpush1.bf16.xpose.msra.mxu0 0
    %639 = vmatprep.mubr.bf16.mxu0 0
    %640 = vmatmul.mubr.bf16.gmra.mrb[0].mxu0 %v602
    %v641 = vpop.f32.mrb[0].mxu0
    %v642 = vadd.f32 %v339, %v641
    %v643 = vpop.f32.mrb[0].mxu0
    %v644 = vpop.f32.mrb[0].mxu0
    %v645 = vadd.f32 %v340, %v644
    %v646 = vpop.f32.mrb[0].mxu0
    %647 = vdwg.mxu0
    %v648 = vsel %vm392, %v642, -inf
    %649 = vmax.xlane.f32.xlu0 %v648
    %v650 = vpop.xlane.xlu0 %649
    %v651 = vsel %vm392, %v645, -inf
    %652 = vmax.xlane.f32.xlu0 %v651
    %v653 = vpop.xlane.xlu0 %652
    %v654 = vsub.f32 %v642, %v650
    %v655 = vsub.f32 %v645, %v653
    %v656 = vmul.f32 %v654, 1.442695
    %v657 = vpow.pop %v656
    %v658 = vmul.f32 %v655, 1.442695
    %v659 = vpow.pop %v658
    %v660 = vsel %vm392, %v657, 0.0
    %661 = vadd.xlane.f32.xlu0 %v660
    %v662 = vpop.xlane.xlu0 %661
    %v663 = vsel %vm392, %v659, 0.0
    %664 = vadd.xlane.f32.xlu0 %v663
    %v665 = vpop.xlane.xlu0 %664
    %v666 = vrcp.pop %v662
    %v667 = vrcp.pop %v665
    %v668 = vmul.f32 %v657, %v666
    %v669 = vmul.f32 %v659, %v667
    %v670 = vpack.c.bf16 %v669, %v668
    %671 = vrot.lane.b32.xlu0 %v343, 112
    %v672 = vpop.permute.xlu0 %671
    %v675 = vsel %vm392, %v670, 0
    %677 = vmatprep.subr.bf16.mxu0 0
    %678 = vmatpush1.bf16.msra.mxu0 %v672
    %679 = vmatprep.subr.bf16.mxu0 0
    %680 = vmatpush1.bf16.msra.mxu0 0
    %681 = vmatprep.subr.bf16.mxu0 0
    %682 = vmatpush1.bf16.msra.mxu0 0
    %683 = vmatprep.subr.bf16.mxu0 0
    %684 = vmatpush1.bf16.msra.mxu0 0
    %685 = vmatprep.subr.bf16.mxu0 0
    %686 = vmatpush1.bf16.msra.mxu0 0
    %687 = vmatprep.subr.bf16.mxu0 0
    %688 = vmatpush1.bf16.msra.mxu0 0
    %689 = vmatprep.subr.bf16.mxu0 0
    %690 = vmatpush1.bf16.msra.mxu0 0
    %691 = vmatprep.subr.bf16.mxu0 0
    %692 = vmatpush1.bf16.msra.mxu0 0
    %693 = vmatprep.subr.bf16.mxu0 0
    %694 = vmatpush1.bf16.msra.mxu0 0
    %695 = vmatprep.subr.bf16.mxu0 0
    %696 = vmatpush1.bf16.msra.mxu0 0
    %697 = vmatprep.subr.bf16.mxu0 0
    %698 = vmatpush1.bf16.msra.mxu0 0
    %699 = vmatprep.subr.bf16.mxu0 0
    %700 = vmatpush1.bf16.msra.mxu0 0
    %701 = vmatprep.subr.bf16.mxu0 0
    %702 = vmatpush1.bf16.msra.mxu0 0
    %703 = vmatprep.subr.bf16.mxu0 0
    %704 = vmatpush1.bf16.msra.mxu0 0
    %705 = vmatprep.subr.bf16.mxu0 0
    %706 = vmatpush1.bf16.msra.mxu0 0
    %707 = vmatprep.subr.bf16.mxu0 0
    %708 = vmatpush1.bf16.msra.mxu0 0
    %709 = vmatprep.mubr.bf16.mxu0 0
    %710 = vmatmul.mubr.bf16.gmra.mrb[0].mxu0 %v675
    %v711 = vpop.f32.mrb[0].mxu0
    %v712 = vadd.f32 0.0, %v711
    %v713 = vpop.f32.mrb[0].mxu0
    %v714 = vpop.f32.mrb[0].mxu0
    %v715 = vadd.f32 0.0, %v714
    %v716 = vpop.f32.mrb[0].mxu0
    %717 = vdwg.mxu0
    %720 = vrot.lane.b32.xlu0 %v712, 16
    %v721 = vpop.permute.xlu0 %720
    %722 = vrot.lane.b32.xlu0 %v715, 16
    %v723 = vpop.permute.xlu0 %722
    %vm726 = vcmask 195712
    %727 = vst.msk [vmem:[#allocation2] sm:$0xff] %vm726, %v721
    %728 = vst.msk [vmem:[#allocation2 + $0x8] sm:$0xff] %vm726, %v723
    %729 = vrot.lane.b32.xlu0 %v341, 104
    %v730 = vpop.permute.xlu0 %729
    %731 = vrot.lane.b32.xlu0 %v342, 104
    %v732 = vpop.permute.xlu0 %731
    %v734 = vsel %vm344, %v730, 0
    %v737 = vsel %vm344, %v732, 0
    %739 = vmatprep.subr.bf16.mxu0 0
    %740 = vmatpush1.bf16.xpose.msra.mxu0 %v737
    %741 = vmatprep.subr.bf16.mxu0 0
    %742 = vmatpush1.bf16.xpose.msra.mxu0 0
    %743 = vmatprep.subr.bf16.mxu0 0
    %744 = vmatpush1.bf16.xpose.msra.mxu0 0
    %745 = vmatprep.subr.bf16.mxu0 0
    %746 = vmatpush1.bf16.xpose.msra.mxu0 0
    %747 = vmatprep.subr.bf16.mxu0 0
    %748 = vmatpush1.bf16.xpose.msra.mxu0 0
    %749 = vmatprep.subr.bf16.mxu0 0
    %750 = vmatpush1.bf16.xpose.msra.mxu0 0
    %751 = vmatprep.subr.bf16.mxu0 0
    %752 = vmatpush1.bf16.xpose.msra.mxu0 0
    %753 = vmatprep.subr.bf16.mxu0 0
    %754 = vmatpush1.bf16.xpose.msra.mxu0 0
    %755 = vmatprep.subr.bf16.mxu0 0
    %756 = vmatpush1.bf16.xpose.msra.mxu0 0
    %757 = vmatprep.subr.bf16.mxu0 0
    %758 = vmatpush1.bf16.xpose.msra.mxu0 0
    %759 = vmatprep.subr.bf16.mxu0 0
    %760 = vmatpush1.bf16.xpose.msra.mxu0 0
    %761 = vmatprep.subr.bf16.mxu0 0
    %762 = vmatpush1.bf16.xpose.msra.mxu0 0
    %763 = vmatprep.subr.bf16.mxu0 0
    %764 = vmatpush1.bf16.xpose.msra.mxu0 0
    %765 = vmatprep.subr.bf16.mxu0 0
    %766 = vmatpush1.bf16.xpose.msra.mxu0 0
    %767 = vmatprep.subr.bf16.mxu0 0
    %768 = vmatpush1.bf16.xpose.msra.mxu0 0
    %769 = vmatprep.subr.bf16.mxu0 0
    %770 = vmatpush1.bf16.xpose.msra.mxu0 0
    %771 = vmatprep.mubr.bf16.mxu0 0
    %772 = vmatmul.mubr.bf16.gmra.mrb[0].mxu0 %v734
    %v773 = vpop.f32.mrb[0].mxu0
    %v774 = vadd.f32 %v339, %v773
    %v775 = vpop.f32.mrb[0].mxu0
    %v776 = vpop.f32.mrb[0].mxu0
    %v777 = vadd.f32 %v340, %v776
    %v778 = vpop.f32.mrb[0].mxu0
    %779 = vdwg.mxu0
    %v780 = vsel %vm392, %v774, -inf
    %781 = vmax.xlane.f32.xlu0 %v780
    %v782 = vpop.xlane.xlu0 %781
    %v783 = vsel %vm392, %v777, -inf
    %784 = vmax.xlane.f32.xlu0 %v783
    %v785 = vpop.xlane.xlu0 %784
    %v786 = vsub.f32 %v774, %v782
    %v787 = vsub.f32 %v777, %v785
    %v788 = vmul.f32 %v786, 1.442695
    %v789 = vpow.pop %v788
    %v790 = vmul.f32 %v787, 1.442695
    %v791 = vpow.pop %v790
    %v792 = vsel %vm392, %v789, 0.0
    %793 = vadd.xlane.f32.xlu0 %v792
    %v794 = vpop.xlane.xlu0 %793
    %v795 = vsel %vm392, %v791, 0.0
    %796 = vadd.xlane.f32.xlu0 %v795
    %v797 = vpop.xlane.xlu0 %796
    %v798 = vrcp.pop %v794
    %v799 = vrcp.pop %v797
    %v800 = vmul.f32 %v789, %v798
    %v801 = vmul.f32 %v791, %v799
    %v802 = vpack.c.bf16 %v801, %v800
    %803 = vrot.lane.b32.xlu0 %v343, 104
    %v804 = vpop.permute.xlu0 %803
    %v807 = vsel %vm392, %v802, 0
    %809 = vmatprep.subr.bf16.mxu0 0
    %810 = vmatpush1.bf16.msra.mxu0 %v804
    %811 = vmatprep.subr.bf16.mxu0 0
    %812 = vmatpush1.bf16.msra.mxu0 0
    %813 = vmatprep.subr.bf16.mxu0 0
    %814 = vmatpush1.bf16.msra.mxu0 0
    %815 = vmatprep.subr.bf16.mxu0 0
    %816 = vmatpush1.bf16.msra.mxu0 0
    %817 = vmatprep.subr.bf16.mxu0 0
    %818 = vmatpush1.bf16.msra.mxu0 0
    %819 = vmatprep.subr.bf16.mxu0 0
    %820 = vmatpush1.bf16.msra.mxu0 0
    %821 = vmatprep.subr.bf16.mxu0 0
    %822 = vmatpush1.bf16.msra.mxu0 0
    %823 = vmatprep.subr.bf16.mxu0 0
    %824 = vmatpush1.bf16.msra.mxu0 0
    %825 = vmatprep.subr.bf16.mxu0 0
    %826 = vmatpush1.bf16.msra.mxu0 0
    %827 = vmatprep.subr.bf16.mxu0 0
    %828 = vmatpush1.bf16.msra.mxu0 0
    %829 = vmatprep.subr.bf16.mxu0 0
    %830 = vmatpush1.bf16.msra.mxu0 0
    %831 = vmatprep.subr.bf16.mxu0 0
    %832 = vmatpush1.bf16.msra.mxu0 0
    %833 = vmatprep.subr.bf16.mxu0 0
    %834 = vmatpush1.bf16.msra.mxu0 0
    %835 = vmatprep.subr.bf16.mxu0 0
    %836 = vmatpush1.bf16.msra.mxu0 0
    %837 = vmatprep.subr.bf16.mxu0 0
    %838 = vmatpush1.bf16.msra.mxu0 0
    %839 = vmatprep.subr.bf16.mxu0 0
    %840 = vmatpush1.bf16.msra.mxu0 0
    %841 = vmatprep.mubr.bf16.mxu0 0
    %842 = vmatmul.mubr.bf16.gmra.mrb[0].mxu0 %v807
    %v843 = vpop.f32.mrb[0].mxu0
    %v844 = vadd.f32 0.0, %v843
    %v845 = vpop.f32.mrb[0].mxu0
    %v846 = vpop.f32.mrb[0].mxu0
    %v847 = vadd.f32 0.0, %v846
    %v848 = vpop.f32.mrb[0].mxu0
    %849 = vdwg.mxu0
    %852 = vrot.lane.b32.xlu0 %v844, 24
    %v853 = vpop.permute.xlu0 %852
    %854 = vrot.lane.b32.xlu0 %v847, 24
    %v855 = vpop.permute.xlu0 %854
    %vm858 = vcmask 261312
    %859 = vst.msk [vmem:[#allocation2] sm:$0xff] %vm858, %v853
    %860 = vst.msk [vmem:[#allocation2 + $0x8] sm:$0xff] %vm858, %v855
    %v861 = vld [vmem:[#allocation2] sm:$0xff]
    %v862 = vld [vmem:[#allocation2 + $0x8] sm:$0xff]
    %v863 = vpack.c.bf16 %v862, %v861
    %v864 = vld [vmem:[#allocation9] sm:$0xf]
    %v865 = vld [vmem:[#allocation9 + $0x4] sm:$0xf]
    %v866 = vld [vmem:[#allocation9 + $0x8] sm:$0xf]
    %v867 = vld [vmem:[#allocation9 + $0xc] sm:$0xf]
    %v868 = vld [vmem:[%s5] sm:$0x1]
    %v870 = vlaneseq
    %v871 = vshrl.u32 %v870, 7
    %v872 = vsub.s32 0, %v871
    %v873 = vrot.slane %v868, %v872
    %v879 = vunpack.c.l.b16 %v864
    %v880 = vunpack.c.l.b16 %v865
    %v881 = vunpack.c.l.b16 %v866
    %v882 = vunpack.c.l.b16 %v867
    %v883 = vpack.c.b16 %v880, %v879
    %v884 = vpack.c.b16 %v882, %v881
    %v888 = vsel %vm174, %v863, 0
    %890 = vmatprep.subr.bf16.mxu0 0
    %891 = vmatpush1.bf16.msra.mxu0 %v883
    %892 = vmatprep.subr.bf16.mxu0 0
    %893 = vmatpush1.bf16.msra.mxu0 %v884
    %894 = vmatprep.subr.bf16.mxu0 0
    %895 = vmatpush1.bf16.msra.mxu0 0
    %896 = vmatprep.subr.bf16.mxu0 0
    %897 = vmatpush1.bf16.msra.mxu0 0
    %898 = vmatprep.subr.bf16.mxu0 0
    %899 = vmatpush1.bf16.msra.mxu0 0
    %900 = vmatprep.subr.bf16.mxu0 0
    %901 = vmatpush1.bf16.msra.mxu0 0
    %902 = vmatprep.subr.bf16.mxu0 0
    %903 = vmatpush1.bf16.msra.mxu0 0
    %904 = vmatprep.subr.bf16.mxu0 0
    %905 = vmatpush1.bf16.msra.mxu0 0
    %906 = vmatprep.subr.bf16.mxu0 0
    %907 = vmatpush1.bf16.msra.mxu0 0
    %908 = vmatprep.subr.bf16.mxu0 0
    %909 = vmatpush1.bf16.msra.mxu0 0
    %910 = vmatprep.subr.bf16.mxu0 0
    %911 = vmatpush1.bf16.msra.mxu0 0
    %912 = vmatprep.subr.bf16.mxu0 0
    %913 = vmatpush1.bf16.msra.mxu0 0
    %914 = vmatprep.subr.bf16.mxu0 0
    %915 = vmatpush1.bf16.msra.mxu0 0
    %916 = vmatprep.subr.bf16.mxu0 0
    %917 = vmatpush1.bf16.msra.mxu0 0
    %918 = vmatprep.subr.bf16.mxu0 0
    %919 = vmatpush1.bf16.msra.mxu0 0
    %920 = vmatprep.subr.bf16.mxu0 0
    %921 = vmatpush1.bf16.msra.mxu0 0
    %922 = vmatprep.mubr.bf16.mxu0 0
    %923 = vmatmul.mubr.bf16.gmra.mrb[0].mxu0 %v888
    %v924 = vpop.f32.mrb[0].mxu0
    %v925 = vadd.f32 %v873, %v924
    %v926 = vpop.f32.mrb[0].mxu0
    %v927 = vpop.f32.mrb[0].mxu0
    %v928 = vadd.f32 %v873, %v927
    %v929 = vpop.f32.mrb[0].mxu0
    %930 = vdwg.mxu0
    %931 = vst.msk [vmem:[#allocation11] sm:$0xff] %vm174, %v925
    %932 = vst.msk [vmem:[#allocation11 + $0x8] sm:$0xff] %vm174, %v928
    // Predicated region
    $region42: #{tpu_custom_call.1} parent=1 // pred_check
      _
    $region43: #{tpu_custom_call.1} parent=1 // pred_check_branch
      %934 = sbr.rel (0) target = $region45
    $region44: #{tpu_custom_call.1} parent=1 // pred_region
      %s936 = ssub.s32 256, 256
      %937 = vsyncadd [#allocation5], %s936
      %s938 = sshll.u32 [#allocation11], 4
      %s939 = int_to_ptr.vmem [resolvable:$true] %s938
      %944 = dma.vmem_to_hbm [thread:$0]  %s939, 256, %s6, [#allocation5], 128, 128, 8
    $region45: #{tpu_custom_call.1} parent=1 // pred_fallthru
      _
    // Predicated region
    $region46: #{tpu_custom_call.1} parent=1 // pred_check
      _
    $region47: #{tpu_custom_call.1} parent=1 // pred_check_branch
      %946 = sbr.rel (0) target = $region49
    $region48: #{tpu_custom_call.1} parent=1 // pred_region
      %947 = dma.done [#allocation5], 256
    $region49: #{tpu_custom_call.1} parent=1 // pred_fallthru
      _
    %948 = vsyncpa [#allocation4], 1
    %949 = vsyncpa [#allocation7], 1
    %950 = vsyncpa [#allocation10], 1
    %951 = vsyncpa [#allocation5], 1

</llo_original>
